<compile_context>
chip_gen: v6e
topology: v6e:2x2x1
jax: 0.10.0
libtpu: 0.0.40
codegen_flags: <defaults>
</compile_context>

<pallas_src>
import functools

import jax
import jax.numpy as jnp
from jax.experimental import pallas as pl
from jax.experimental.pallas import tpu as pltpu

INPUT_SIZE = 784
HIDDEN_SIZE = 100
NUM_CLASSES = 10

HIDDEN_PAD = 128   # hidden dim padded to a full lane width
OUT_PAD = 128      # class dim padded to a full lane width


def _round_up(x, m):
    return ((x + m - 1) // m) * m


def mlp_kernel(x_ref, w1_ref, b1_ref, w2_ref, b2_ref, o_ref):
    # x arrives as f32 straight from HBM (single pass); cast to bf16 on the
    # VPU for the MXU -- hidden under DMA since the kernel is mem-bound.
    x = x_ref[...].astype(jnp.bfloat16)
    # Layer 1: bf16 MXU matmul, f32 accumulate; bias-add + ReLU in f32 (VPU).
    h = jnp.dot(x, w1_ref[...], preferred_element_type=jnp.float32)
    h = jnp.maximum(h + b1_ref[...], 0.0)
    # Layer 2: cast activations to bf16 for the MXU, accumulate in f32.
    out = jnp.dot(h.astype(jnp.bfloat16), w2_ref[...],
                  preferred_element_type=jnp.float32)
    # bf16, 128-lane-wide store: unmasked vst, half the write bytes of f32.
    o_ref[...] = (out + b2_ref[...]).astype(o_ref.dtype)


def neural_net_forward(x, w1p, b1p, w2p, b2p, *, tile_b=1024):
    """x: [B, 784] f32.  Padded params:
         w1p: [784, 128] bf16, b1p: [1, 128] f32,
         w2p: [128, 128] bf16, b2p: [1, 128] f32.
       Returns [B, 10] f32."""
    B = x.shape[0]

    # Batch tile: multiple of 16, no larger than half the batch (rounded up)
    # so there are >= 2 grid steps whenever B > 16 (v7x megacore sharding),
    # and large (default 1024) to amortize the ~0.35 us per-grid-step cost.
    tile_b = max(16, min(tile_b, _round_up(pl.cdiv(B, 2), 16)))
    grid = (pl.cdiv(B, tile_b),)   # last block may run past B; writes masked

    flops = 2 * B * (INPUT_SIZE * HIDDEN_PAD + HIDDEN_PAD * OUT_PAD)
    bytes_accessed = (
        x.size * 4                      # f32 activations (single HBM pass)
        + w1p.size * 2 + w2p.size * 2   # bf16 weights
        + b1p.size * 4 + b2p.size * 4   # f32 biases
        + B * OUT_PAD * 2               # bf16 output slab
    )

    out_padded = pl.pallas_call(
        mlp_kernel,
        out_shape=jax.ShapeDtypeStruct((B, OUT_PAD), jnp.bfloat16),
        grid_spec=pltpu.PrefetchScalarGridSpec(
            num_scalar_prefetch=0,
            grid=grid,
            in_specs=[
                # Activations: tiled over the batch grid axis, f32 from HBM.
                pl.BlockSpec((tile_b, INPUT_SIZE), lambda i: (i, 0)),
                # Weights / biases: constant block index -> VMEM-resident.
                pl.BlockSpec((INPUT_SIZE, HIDDEN_PAD), lambda i: (0, 0)),
                pl.BlockSpec((1, HIDDEN_PAD), lambda i: (0, 0)),
                pl.BlockSpec((HIDDEN_PAD, OUT_PAD), lambda i: (0, 0)),
                pl.BlockSpec((1, OUT_PAD), lambda i: (0, 0)),
            ],
            out_specs=pl.BlockSpec((tile_b, OUT_PAD), lambda i: (i, 0)),
        ),
        compiler_params=pltpu.CompilerParams(
            dimension_semantics=("parallel",),   # shard batch across TCs (v7x)
        ),
        cost_estimate=pl.CostEstimate(
            flops=flops, transcendentals=0, bytes_accessed=bytes_accessed),
    )(x, w1p, b1p, w2p, b2p)

    # Narrow slice out of the lane-dense bf16 slab; upcast the tiny [B,10]
    # result to f32 for the caller.
    return out_padded[:, :NUM_CLASSES].astype(jnp.float32)


def init_params(key):
    """Deterministic init mimicking torch.nn.Linear (uniform(-1/sqrt(fan_in), +)).
    Returns f32 master weights stored pre-transposed as [in, out]."""
    k1, k2, k3, k4 = jax.random.split(key, 4)
    bound1 = 1.0 / (INPUT_SIZE ** 0.5)
    bound2 = 1.0 / (HIDDEN_SIZE ** 0.5)
    w1 = jax.random.uniform(k1, (INPUT_SIZE, HIDDEN_SIZE), jnp.float32, -bound1, bound1)
    b1 = jax.random.uniform(k2, (1, HIDDEN_SIZE), jnp.float32, -bound1, bound1)
    w2 = jax.random.uniform(k3, (HIDDEN_SIZE, NUM_CLASSES), jnp.float32, -bound2, bound2)
    b2 = jax.random.uniform(k4, (1, NUM_CLASSES), jnp.float32, -bound2, bound2)
    return w1, b1, w2, b2


def pad_params(w1, b1, w2, b2):
    """Zero-pad to lane-dense shapes; weights stored bf16 at rest."""
    w1p = jnp.zeros((INPUT_SIZE, HIDDEN_PAD), jnp.bfloat16)
    w1p = w1p.at[:, :HIDDEN_SIZE].set(w1.astype(jnp.bfloat16))
    b1p = jnp.zeros((1, HIDDEN_PAD), jnp.float32).at[:, :HIDDEN_SIZE].set(b1)
    w2p = jnp.zeros((HIDDEN_PAD, OUT_PAD), jnp.bfloat16)
    w2p = w2p.at[:HIDDEN_SIZE, :NUM_CLASSES].set(w2.astype(jnp.bfloat16))
    b2p = jnp.zeros((1, OUT_PAD), jnp.float32).at[:, :NUM_CLASSES].set(b2)
    return w1p, b1p, w2p, b2p


def reference_forward(x, w1, b1, w2, b2):
    """Pure-JAX reference using the same bf16-input / f32-accumulate numerics
    (kernel additionally rounds the final logits to bf16 on store)."""
    h = jnp.dot(x.astype(jnp.bfloat16), w1.astype(jnp.bfloat16),
                preferred_element_type=jnp.float32) + b1
    h = jnp.maximum(h, 0.0)
    out = jnp.dot(h.astype(jnp.bfloat16), w2.astype(jnp.bfloat16),
                  preferred_element_type=jnp.float32) + b2
    return out


if __name__ == "__main__":
    key = jax.random.PRNGKey(0)
    kx, kp = jax.random.split(key)

    # Small MNIST-style batch; 40 rows exercises both a multi-step grid
    # (tile_b clamps to 32 -> 2 steps) and a partial (masked) last block.
    B = 40
    x = jax.random.normal(kx, (B, INPUT_SIZE), dtype=jnp.float32)
    w1, b1, w2, b2 = init_params(kp)
    w1p, b1p, w2p, b2p = pad_params(w1, b1, w2, b2)

    fwd = jax.jit(functools.partial(neural_net_forward, tile_b=1024))
    out = fwd(x, w1p, b1p, w2p, b2p)
    out = jax.block_until_ready(out)

    ref = reference_forward(x, w1, b1, w2, b2)
    assert out.shape == (B, NUM_CLASSES)
    # Tolerance accounts for the bf16 logit store (~2^-8 relative rounding).
    assert jnp.allclose(out, ref, atol=2e-2, rtol=2e-2), (
        float(jnp.max(jnp.abs(out - ref))))

    print("KERNEL_OK")
</pallas_src>

<mosaic_0001>
module attributes {stable_mosaic.version = 11 : i64} {
  func.func @mlp_kernel(%arg0: i32, %arg1: memref<32x784xf32, #tpu.memory_space<vmem>>, %arg2: memref<784x128xbf16, #tpu.memory_space<vmem>>, %arg3: memref<1x128xf32, #tpu.memory_space<vmem>>, %arg4: memref<128x128xbf16, #tpu.memory_space<vmem>>, %arg5: memref<1x128xf32, #tpu.memory_space<vmem>>, %arg6: memref<32x128xbf16, #tpu.memory_space<vmem>>) attributes {dimension_semantics = [#tpu.dimension_semantics<parallel>], iteration_bounds = array<i64: 2>, scalar_prefetch = 0 : i64, scratch_operands = 0 : i64, tpu.core_type = #tpu.core_type<tc>, window_params = [{transform_indices = @transform_0, window_bounds = array<i64: 32, 784>}, {pipeline_mode = #tpu.pipeline_mode<synchronous>, transform_indices = @transform_1, window_bounds = array<i64: 784, 128>}, {pipeline_mode = #tpu.pipeline_mode<synchronous>, transform_indices = @transform_2, window_bounds = array<i64: 1, 128>}, {pipeline_mode = #tpu.pipeline_mode<synchronous>, transform_indices = @transform_3, window_bounds = array<i64: 128, 128>}, {pipeline_mode = #tpu.pipeline_mode<synchronous>, transform_indices = @transform_4, window_bounds = array<i64: 1, 128>}, {transform_indices = @transform_5, window_bounds = array<i64: 32, 128>}]} {
    %c0 = arith.constant 0 : index
    %c0_0 = arith.constant 0 : index
    %0 = vector.load %arg1[%c0, %c0_0] : memref<32x784xf32, #tpu.memory_space<vmem>>, vector<32x784xf32>
    %1 = arith.truncf %0 : vector<32x784xf32> to vector<32x784xbf16>
    %c0_1 = arith.constant 0 : index
    %c0_2 = arith.constant 0 : index
    %2 = vector.load %arg2[%c0_1, %c0_2] : memref<784x128xbf16, #tpu.memory_space<vmem>>, vector<784x128xbf16>
    %cst = arith.constant dense<0.000000e+00> : vector<32x128xf32>
    %3 = tpu.matmul %1, %2, %cst {dimension_numbers = #tpu.dot_dimension_numbers<[1], [0], [0], [1], [0, 0, 1, 1], [], []>} : vector<32x784xbf16>, vector<784x128xbf16>, vector<32x128xf32> -> vector<32x128xf32>
    %c0_3 = arith.constant 0 : index
    %c0_4 = arith.constant 0 : index
    %4 = vector.load %arg3[%c0_3, %c0_4] : memref<1x128xf32, #tpu.memory_space<vmem>>, vector<1x128xf32>
    %5 = vector.broadcast %4 : vector<1x128xf32> to vector<32x128xf32>
    %6 = arith.addf %3, %5 : vector<32x128xf32>
    %cst_5 = arith.constant 0.000000e+00 : f32
    %7 = vector.broadcast %cst_5 : f32 to vector<32x128xf32>
    %8 = arith.maximumf %6, %7 : vector<32x128xf32>
    %9 = arith.truncf %8 : vector<32x128xf32> to vector<32x128xbf16>
    %c0_6 = arith.constant 0 : index
    %c0_7 = arith.constant 0 : index
    %10 = vector.load %arg4[%c0_6, %c0_7] : memref<128x128xbf16, #tpu.memory_space<vmem>>, vector<128x128xbf16>
    %cst_8 = arith.constant dense<0.000000e+00> : vector<32x128xf32>
    %11 = tpu.matmul %9, %10, %cst_8 {dimension_numbers = #tpu.dot_dimension_numbers<[1], [0], [0], [1], [0, 0, 1, 1], [], []>} : vector<32x128xbf16>, vector<128x128xbf16>, vector<32x128xf32> -> vector<32x128xf32>
    %c0_9 = arith.constant 0 : index
    %c0_10 = arith.constant 0 : index
    %12 = vector.load %arg5[%c0_9, %c0_10] : memref<1x128xf32, #tpu.memory_space<vmem>>, vector<1x128xf32>
    %13 = vector.broadcast %12 : vector<1x128xf32> to vector<32x128xf32>
    %14 = arith.addf %11, %13 : vector<32x128xf32>
    %15 = arith.truncf %14 : vector<32x128xf32> to vector<32x128xbf16>
    %c0_11 = arith.constant 0 : index
    %c0_12 = arith.constant 0 : index
    %16 = vector.load %arg6[%c0_11, %c0_12] : memref<32x128xbf16, #tpu.memory_space<vmem>>, vector<32x128xbf16>
    tpu.vector_store %arg6[%c0_11, %c0_12], %15 {strides = array<i32>} : memref<32x128xbf16, #tpu.memory_space<vmem>>, vector<32x128xbf16>,
    return
  }
  func.func @transform_0(%arg0: i32) -> (i32, i32) {
    %c0_i32 = arith.constant 0 : i32
    %c0_i32_0 = arith.constant 0 : i32
    return %arg0, %c0_i32 : i32, i32
  }
  func.func @transform_1(%arg0: i32) -> (i32, i32) {
    %c0_i32 = arith.constant 0 : i32
    %c0_i32_0 = arith.constant 0 : i32
    %c0_i32_1 = arith.constant 0 : i32
    return %c0_i32, %c0_i32_0 : i32, i32
  }
  func.func @transform_2(%arg0: i32) -> (i32, i32) {
    %c0_i32 = arith.constant 0 : i32
    %c0_i32_0 = arith.constant 0 : i32
    %c0_i32_1 = arith.constant 0 : i32
    return %c0_i32, %c0_i32_0 : i32, i32
  }
  func.func @transform_3(%arg0: i32) -> (i32, i32) {
    %c0_i32 = arith.constant 0 : i32
    %c0_i32_0 = arith.constant 0 : i32
    %c0_i32_1 = arith.constant 0 : i32
    return %c0_i32, %c0_i32_0 : i32, i32
  }
  func.func @transform_4(%arg0: i32) -> (i32, i32) {
    %c0_i32 = arith.constant 0 : i32
    %c0_i32_0 = arith.constant 0 : i32
    %c0_i32_1 = arith.constant 0 : i32
    return %c0_i32, %c0_i32_0 : i32, i32
  }
  func.func @transform_5(%arg0: i32) -> (i32, i32) {
    %c0_i32 = arith.constant 0 : i32
    %c0_i32_0 = arith.constant 0 : i32
    return %arg0, %c0_i32 : i32, i32
  }
}

</mosaic_0001>

<llo_original>
// kernel: neural_net_forward.1
$region0: #{neural_net_forward.1}
  #allocation0 [shape = 'u32[]', space=smem, size = 0x4, offset = 0x4, fixed_abs, tag = 'smem constant byte address 0x4 - core index']
  #allocation1 [shape = 'u32[144,128]{1,0:T(1,128)}', space=vmem, size = 0x12000, scoped, tag = 'internal scratch']
  %s0 = inlined_call_operand.hbm [shape: f32[40,784], index: 0, kind: input, shape index: {}]
  %s1 = inlined_call_operand.hbm [shape: bf16[784,128], index: 1, kind: input, shape index: {}]
  %s2 = inlined_call_operand.vmem [shape: f32[1,128], index: 2, kind: input, shape index: {}]
  %s3 = inlined_call_operand.hbm [shape: bf16[128,128], index: 3, kind: input, shape index: {}]
  %s4 = inlined_call_operand.vmem [shape: f32[1,128], index: 4, kind: input, shape index: {}]
  %s5 = inlined_call_operand.vmem [shape: bf16[40,128], index: 5, kind: output, shape index: {}]
  %s6 = sld [smem:[#allocation0]]
  $region109: #{neural_net_forward.1} parent=0
    _
  %s8 = ssub.s32 1, %s6
  %s9 = scalar_select 0, %s8, %s6
  $region1: #{neural_net_forward.1} parent=0
    #allocation2 [shape = 'u8[229376]{0}', space=vmem, size = 0x38000, scoped, tag = 'input window, operand 0']
    #allocation3 [shape = 's32[2]{0}', space=sflag, size = 0x8, scoped, tag = 'scoped memory for neural_net_forward.1']
    #allocation4 [shape = 'u8[200704]{0}', space=vmem, size = 0x31000, scoped, tag = 'input window, operand 1, single buffered']
    #allocation5 [shape = 's32[1]{0}', space=sflag, size = 0x4, scoped, tag = 'scoped memory for neural_net_forward.1']
    #allocation6 [shape = 'u8[32768]{0}', space=vmem, size = 0x8000, scoped, tag = 'input window, operand 3, single buffered']
    #allocation7 [shape = 'u8[16384]{0}', space=vmem, size = 0x4000, scoped, tag = 'output window, operand 0']
    %10 = vsyncpa [#allocation3], 0
    %s11 = scalar_lea.sflag [#allocation3], 1
    %12 = vsyncpa %s11, 0
    %13 = vsyncpa [#allocation5], 0
    loop: start=0, step=1, limit=4
    $region2: #{neural_net_forward.1} parent=1 // loop_pre_header
      _
    $region3: #{neural_net_forward.1} parent=1 // loop_header
      %s15 = sphi 0, %s19
      %p16 = scmp.ge.s32.totalorder %s15, 4
      %s25 = sphi 0, %s27
      %s28 = sphi 0, %s25
      %s29 = sphi 0, %s28
      %s45 = sphi 0, %s29
      %s49 = sphi 0, %s49
      %s51 = sphi 0, %s49
      %s52 = sphi 0, %s51
      %s66 = sphi 0, %s52
      %s70 = sphi 0, %s70
      %s72 = sphi 0, %s70
      %s73 = sphi 0, %s72
      %s87 = sphi 0, %s73
      %s91 = sphi 0, %s91
      %s93 = sphi 0, %s91
      %s94 = sphi 0, %s93
      %s108 = sphi 0, %s94
      %s112 = sphi 0, %s112
      %s114 = sphi 0, %s112
      %s115 = sphi 0, %s114
      %s129 = sphi 0, %s115
      %s135 = sphi 0, %s137
      %s138 = sphi 0, %s135
      %s139 = sphi 0, %s138
      %s155 = sphi 0, %s139
    $region4: #{neural_net_forward.1} parent=1 // loop_header_branch
      %18 = sbr.rel (%p16) target = $region8
    $region5: #{neural_net_forward.1} parent=1 // loop_body
      %s20 = ssub.s32 %s15, 1
      %s21 = ssub.s32 %s15, 2
      %s22 = sadd.s32 %s15, 1
      %s23 = ssub.s32 %s15, %s22
      %p24 = scmp.eq.s32.totalorder %s23, 0
      %s26 = sadd.s32 %s25, 1
      %s27 = scalar_select %p24, %s25, %s26
      %p30 = pneg %p24
      %p31 = scmp.eq.s32.totalorder %s15, 1
      %p32 = por %p30, %p31
      %p33 = scmp.ne.s32.totalorder %s25, %s28
      %p34 = scmp.eq.s32.totalorder %s15, 0
      %p35 = por %p33, %p34
      %p36 = scmp.ne.s32.totalorder %s25, %s28
      %p37 = scmp.eq.s32.totalorder %s20, 1
      %p38 = por %p36, %p37
      %p39 = scmp.ne.s32.totalorder %s28, %s29
      %p40 = scmp.eq.s32.totalorder %s20, 0
      %p41 = por %p39, %p40
      %p42 = scmp.ne.s32.totalorder %s28, %s29
      %p43 = scmp.eq.s32.totalorder %s21, 1
      %p44 = por %p42, %p43
      %p46 = scmp.ne.s32.totalorder %s29, %s45
      %p47 = scmp.eq.s32.totalorder %s21, 0
      %p48 = por %p46, %p47
      %s50 = sadd.s32 %s49, 1
      %p53 = scmp.eq.s32.totalorder %s15, 1
      %p54 = scmp.ne.s32.totalorder %s49, %s51
      %p55 = scmp.eq.s32.totalorder %s15, 0
      %p56 = por %p54, %p55
      %p57 = scmp.ne.s32.totalorder %s49, %s51
      %p58 = scmp.eq.s32.totalorder %s20, 1
      %p59 = por %p57, %p58
      %p60 = scmp.ne.s32.totalorder %s51, %s52
      %p61 = scmp.eq.s32.totalorder %s20, 0
      %p62 = por %p60, %p61
      %p63 = scmp.ne.s32.totalorder %s51, %s52
      %p64 = scmp.eq.s32.totalorder %s21, 1
      %p65 = por %p63, %p64
      %p67 = scmp.ne.s32.totalorder %s52, %s66
      %p68 = scmp.eq.s32.totalorder %s21, 0
      %p69 = por %p67, %p68
      %s71 = sadd.s32 %s70, 1
      %p74 = scmp.eq.s32.totalorder %s15, 1
      %p75 = scmp.ne.s32.totalorder %s70, %s72
      %p76 = scmp.eq.s32.totalorder %s15, 0
      %p77 = por %p75, %p76
      %p78 = scmp.ne.s32.totalorder %s70, %s72
      %p79 = scmp.eq.s32.totalorder %s20, 1
      %p80 = por %p78, %p79
      %p81 = scmp.ne.s32.totalorder %s72, %s73
      %p82 = scmp.eq.s32.totalorder %s20, 0
      %p83 = por %p81, %p82
      %p84 = scmp.ne.s32.totalorder %s72, %s73
      %p85 = scmp.eq.s32.totalorder %s21, 1
      %p86 = por %p84, %p85
      %p88 = scmp.ne.s32.totalorder %s73, %s87
      %p89 = scmp.eq.s32.totalorder %s21, 0
      %p90 = por %p88, %p89
      %s92 = sadd.s32 %s91, 1
      %p95 = scmp.eq.s32.totalorder %s15, 1
      %p96 = scmp.ne.s32.totalorder %s91, %s93
      %p97 = scmp.eq.s32.totalorder %s15, 0
      %p98 = por %p96, %p97
      %p99 = scmp.ne.s32.totalorder %s91, %s93
      %p100 = scmp.eq.s32.totalorder %s20, 1
      %p101 = por %p99, %p100
      %p102 = scmp.ne.s32.totalorder %s93, %s94
      %p103 = scmp.eq.s32.totalorder %s20, 0
      %p104 = por %p102, %p103
      %p105 = scmp.ne.s32.totalorder %s93, %s94
      %p106 = scmp.eq.s32.totalorder %s21, 1
      %p107 = por %p105, %p106
      %p109 = scmp.ne.s32.totalorder %s94, %s108
      %p110 = scmp.eq.s32.totalorder %s21, 0
      %p111 = por %p109, %p110
      %s113 = sadd.s32 %s112, 1
      %p116 = scmp.eq.s32.totalorder %s15, 1
      %p117 = scmp.ne.s32.totalorder %s112, %s114
      %p118 = scmp.eq.s32.totalorder %s15, 0
      %p119 = por %p117, %p118
      %p120 = scmp.ne.s32.totalorder %s112, %s114
      %p121 = scmp.eq.s32.totalorder %s20, 1
      %p122 = por %p120, %p121
      %p123 = scmp.ne.s32.totalorder %s114, %s115
      %p124 = scmp.eq.s32.totalorder %s20, 0
      %p125 = por %p123, %p124
      %p126 = scmp.ne.s32.totalorder %s114, %s115
      %p127 = scmp.eq.s32.totalorder %s21, 1
      %p128 = por %p126, %p127
      %p130 = scmp.ne.s32.totalorder %s115, %s129
      %p131 = scmp.eq.s32.totalorder %s21, 0
      %p132 = por %p130, %p131
      %s133 = ssub.s32 %s15, %s22
      %p134 = scmp.eq.s32.totalorder %s133, 0
      %s136 = sadd.s32 %s135, 1
      %s137 = scalar_select %p134, %s135, %s136
      %p140 = pneg %p134
      %p141 = scmp.eq.s32.totalorder %s15, 1
      %p142 = por %p140, %p141
      %p143 = scmp.ne.s32.totalorder %s135, %s138
      %p144 = scmp.eq.s32.totalorder %s15, 0
      %p145 = por %p143, %p144
      %p146 = scmp.ne.s32.totalorder %s135, %s138
      %p147 = scmp.eq.s32.totalorder %s20, 1
      %p148 = por %p146, %p147
      %p149 = scmp.ne.s32.totalorder %s138, %s139
      %p150 = scmp.eq.s32.totalorder %s20, 0
      %p151 = por %p149, %p150
      %p152 = scmp.ne.s32.totalorder %s138, %s139
      %p153 = scmp.eq.s32.totalorder %s21, 1
      %p154 = por %p152, %p153
      %p156 = scmp.ne.s32.totalorder %s139, %s155
      %p157 = scmp.eq.s32.totalorder %s21, 0
      %p158 = por %p156, %p157
      %p159 = scmp.le.s32.totalorder 1, %s15
      %p160 = scmp.lt.s32.totalorder %s15, 3
      %p161 = pnand %p159, %p160
      %p162 = pneg %p161
      // Predicated region
      $region9: #{neural_net_forward.1} parent=5 // pred_check
        _
      $region10: #{neural_net_forward.1} parent=5 // pred_check_branch
        %164 = sbr.rel (%p161) target = $region12
      $region11: #{neural_net_forward.1} parent=5 // pred_region
        %s165 = ssub.s32 %s15, 1
        // Predicated region
        $region13: #{neural_net_forward.1} parent=11 // pred_check
          %p166 = pneg %p62
        $region14: #{neural_net_forward.1} parent=11 // pred_check_branch
          %168 = sbr.rel (%p166) target = $region16
        $region15: #{neural_net_forward.1} parent=11 // pred_region
          %s170 = ssub.s32 6272, 6272
          %171 = vsyncadd [#allocation5], %s170
          %s172 = sshll.u32 [#allocation4], 4
          %s173 = int_to_ptr.vmem [resolvable:$true] %s172
          %178 = dma.hbm_to_vmem [thread:$0]  %s1, 6272, %s173, [#allocation5], 64, 64, 4
        $region16: #{neural_net_forward.1} parent=11 // pred_fallthru
          _
        // Predicated region
        $region17: #{neural_net_forward.1} parent=11 // pred_check
          %p179 = pneg %p83
        $region18: #{neural_net_forward.1} parent=11 // pred_check_branch
          %181 = sbr.rel (%p179) target = $region20
        $region19: #{neural_net_forward.1} parent=11 // pred_region
          _
        $region20: #{neural_net_forward.1} parent=11 // pred_fallthru
          _
        // Predicated region
        $region21: #{neural_net_forward.1} parent=11 // pred_check
          %p182 = pneg %p104
        $region22: #{neural_net_forward.1} parent=11 // pred_check_branch
          %184 = sbr.rel (%p182) target = $region24
        $region23: #{neural_net_forward.1} parent=11 // pred_region
          %s186 = ssub.s32 1024, 1024
          %187 = vsyncadd [#allocation5], %s186
          %s188 = sshll.u32 [#allocation6], 4
          %s189 = int_to_ptr.vmem [resolvable:$true] %s188
          %194 = dma.hbm_to_vmem [thread:$0]  %s3, 1024, %s189, [#allocation5], 64, 64, 4
        $region24: #{neural_net_forward.1} parent=11 // pred_fallthru
          _
        // Predicated region
        $region25: #{neural_net_forward.1} parent=11 // pred_check
          %p195 = pneg %p125
        $region26: #{neural_net_forward.1} parent=11 // pred_check_branch
          %197 = sbr.rel (%p195) target = $region28
        $region27: #{neural_net_forward.1} parent=11 // pred_region
          _
        $region28: #{neural_net_forward.1} parent=11 // pred_fallthru
          _
      $region12: #{neural_net_forward.1} parent=5 // pred_fallthru
        _
      %p198 = scmp.lt.s32.totalorder %s15, 2
      // Predicated region
      $region29: #{neural_net_forward.1} parent=5 // pred_check
        %p199 = pneg %p198
      $region30: #{neural_net_forward.1} parent=5 // pred_check_branch
        %201 = sbr.rel (%p199) target = $region32
      $region31: #{neural_net_forward.1} parent=5 // pred_region
        // Predicated region
        $region33: #{neural_net_forward.1} parent=31 // pred_check
          %p202 = pneg %p35
        $region34: #{neural_net_forward.1} parent=31 // pred_check_branch
          %204 = sbr.rel (%p202) target = $region36
        $region35: #{neural_net_forward.1} parent=31 // pred_region
          %s205 = sand.u32 %s25, 1
          %s206 = scalar_lea.sflag [#allocation3], %s205
          %s207 = sand.u32 %s25, 1
          %s208 = smul.addr %s207, 224
          %s209 = scalar_lea.vmem [#allocation2], %s208
          %s210 = smul.u32 4, %s15
          %s211 = ssub.s32 5, %s210
          %p212 = scmp.lt.s32.totalorder %s211, 4
          %s213 = scalar_select %p212, %s211, 4
          %s214 = smul.u32 128, %s213
          %s215 = smul.u32 %s214, 7
          %s217 = ssub.s32 3584, %s215
          %218 = vsyncadd %s206, %s217
          %p219 = scmp.ne.s32.totalorder 0, %s215
          %s220 = smul.addr %s210, 7
          %s221 = smul.addr %s220, 128
          %s222 = scalar_lea.hbm %s0, %s221
          %s223 = smul.u32 56, %s213
          %s224 = sshll.u32 %s209, 4
          %s225 = int_to_ptr.vmem [resolvable:$true] %s224
          %s226 = sshll.u32 %s223, 4
          %230 = dma.hbm_to_vmem [thread:$0]  (%p219), %s222, %s226, %s225, %s206, 896, 896, 56
        $region36: #{neural_net_forward.1} parent=31 // pred_fallthru
          _
      $region32: #{neural_net_forward.1} parent=5 // pred_fallthru
        _
      %p231 = scmp.le.s32.totalorder 1, %s15
      %p232 = scmp.lt.s32.totalorder %s15, 3
      %p233 = pnand %p231, %p232
      %p234 = pneg %p233
      // Predicated region
      $region37: #{neural_net_forward.1} parent=5 // pred_check
        _
      $region38: #{neural_net_forward.1} parent=5 // pred_check_branch
        %236 = sbr.rel (%p233) target = $region40
      $region39: #{neural_net_forward.1} parent=5 // pred_region
        %s237 = ssub.s32 %s15, 1
        %s238 = sand.u32 %s28, 1
        %s239 = scalar_lea.sflag [#allocation3], %s238
        %s240 = sand.u32 %s28, 1
        %s241 = smul.addr %s240, 224
        %s242 = scalar_lea.vmem [#allocation2], %s241
        // Predicated region
        $region41: #{neural_net_forward.1} parent=39 // pred_check
          %p243 = pneg %p41
        $region42: #{neural_net_forward.1} parent=39 // pred_check_branch
          %245 = sbr.rel (%p243) target = $region44
        $region43: #{neural_net_forward.1} parent=39 // pred_region
          %246 = dma.done %s239, 3584
        $region44: #{neural_net_forward.1} parent=39 // pred_fallthru
          _
        // Predicated region
        $region45: #{neural_net_forward.1} parent=39 // pred_check
          %p247 = pneg %p62
        $region46: #{neural_net_forward.1} parent=39 // pred_check_branch
          %249 = sbr.rel (%p247) target = $region48
        $region47: #{neural_net_forward.1} parent=39 // pred_region
          %250 = dma.done [#allocation5], 6272
        $region48: #{neural_net_forward.1} parent=39 // pred_fallthru
          _
        // Predicated region
        $region49: #{neural_net_forward.1} parent=39 // pred_check
          %p251 = pneg %p104
        $region50: #{neural_net_forward.1} parent=39 // pred_check_branch
          %253 = sbr.rel (%p251) target = $region52
        $region51: #{neural_net_forward.1} parent=39 // pred_region
          %254 = dma.done [#allocation5], 1024
        $region52: #{neural_net_forward.1} parent=39 // pred_fallthru
          _
        %s255 = sand.u32 %s28, 1
        %s256 = scalar_lea.sflag [#allocation3], %s255
        %s257 = sand.u32 %s28, 1
        %s258 = smul.addr %s257, 224
        %s259 = scalar_lea.vmem [#allocation2], %s258
        %p260 = pneg %p41
        %p261 = pneg %p38
        %p262 = pneg %p62
        %p263 = pneg %p59
        %p264 = pneg %p83
        %p265 = pneg %p80
        %p266 = pneg %p104
        %p267 = pneg %p101
        %p268 = pneg %p125
        %p269 = pneg %p122
        %p270 = pneg %p151
        %p271 = pneg %p148
        %s272 = sand.u32 %s138, 1
        %s273 = sand.u32 %s138, 1
        %s274 = smul.addr %s273, 16
        %s275 = scalar_lea.vmem [#allocation7], %s274
        %s276 = smul.u32 4, %s20
        %s277 = ssub.s32 5, %s276
        %p278 = scmp.lt.s32.totalorder %s277, 4
        %s279 = scalar_select %p278, %s277, 4
        %s280 = smul.u32 128, %s279
        %s281 = smul.u32 %s280, 7
        %s282 = smul.u32 4, %s20
        %s283 = ssub.s32 5, %s282
        %p284 = scmp.lt.s32.totalorder %s283, 4
        %s285 = scalar_select %p284, %s283, 4
        %s286 = smul.u32 64, %s285
        %v288 = vld [vmem:[%s242] sm:$0xff]
        %v289 = vld [vmem:[%s242 + $0x8] sm:$0xff]
        %v290 = vld [vmem:[%s242 + $0x10] sm:$0xff]
        %v291 = vld [vmem:[%s242 + $0x18] sm:$0xff]
        %v292 = vld [vmem:[%s242 + $0x20] sm:$0xff]
        %v293 = vld [vmem:[%s242 + $0x28] sm:$0xff]
        %v294 = vld [vmem:[%s242 + $0x30] sm:$0xff]
        %v295 = vld [vmem:[%s242 + $0x38] sm:$0xff]
        %v296 = vld [vmem:[%s242 + $0x40] sm:$0xff]
        %v297 = vld [vmem:[%s242 + $0x48] sm:$0xff]
        %v298 = vld [vmem:[%s242 + $0x50] sm:$0xff]
        %v299 = vld [vmem:[%s242 + $0x58] sm:$0xff]
        %v300 = vld [vmem:[%s242 + $0x60] sm:$0xff]
        %v301 = vld [vmem:[%s242 + $0x68] sm:$0xff]
        %v302 = vld [vmem:[%s242 + $0x70] sm:$0xff]
        %v303 = vld [vmem:[%s242 + $0x78] sm:$0xff]
        %v304 = vld [vmem:[%s242 + $0x80] sm:$0xff]
        %v305 = vld [vmem:[%s242 + $0x88] sm:$0xff]
        %v306 = vld [vmem:[%s242 + $0x90] sm:$0xff]
        %v307 = vld [vmem:[%s242 + $0x98] sm:$0xff]
        %v308 = vld [vmem:[%s242 + $0xa0] sm:$0xff]
        %v309 = vld [vmem:[%s242 + $0xa8] sm:$0xff]
        %v310 = vld [vmem:[%s242 + $0xb0] sm:$0xff]
        %v311 = vld [vmem:[%s242 + $0xb8] sm:$0xff]
        %v312 = vld [vmem:[%s242 + $0xc0] sm:$0xff]
        %v313 = vld [vmem:[%s242 + $0xc8] sm:$0xff]
        %v314 = vld [vmem:[%s242 + $0xd0] sm:$0xff]
        %v315 = vld [vmem:[%s242 + $0xd8] sm:$0xff]
        %v316 = vpack.c.bf16 %v295, %v288
        %v317 = vpack.c.bf16 %v296, %v289
        %v318 = vpack.c.bf16 %v297, %v290
        %v319 = vpack.c.bf16 %v298, %v291
        %v320 = vpack.c.bf16 %v299, %v292
        %v321 = vpack.c.bf16 %v300, %v293
        %v322 = vpack.c.bf16 %v301, %v294
        %v323 = vpack.c.bf16 %v309, %v302
        %v324 = vpack.c.bf16 %v310, %v303
        %v325 = vpack.c.bf16 %v311, %v304
        %v326 = vpack.c.bf16 %v312, %v305
        %v327 = vpack.c.bf16 %v313, %v306
        %v328 = vpack.c.bf16 %v314, %v307
        %v329 = vpack.c.bf16 %v315, %v308
        %v330 = vld [vmem:[#allocation4] sm:$0xf]
        %v331 = vld [vmem:[#allocation4 + $0x4] sm:$0xf]
        %v332 = vld [vmem:[#allocation4 + $0x8] sm:$0xf]
        %v333 = vld [vmem:[#allocation4 + $0xc] sm:$0xf]
        %v334 = vld [vmem:[#allocation4 + $0x10] sm:$0xf]
        %v335 = vld [vmem:[#allocation4 + $0x14] sm:$0xf]
        %v336 = vld [vmem:[#allocation4 + $0x18] sm:$0xf]
        %v337 = vld [vmem:[#allocation4 + $0x1c] sm:$0xf]
        %v338 = vld [vmem:[#allocation4 + $0x20] sm:$0xf]
        %v339 = vld [vmem:[#allocation4 + $0x24] sm:$0xf]
        %v340 = vld [vmem:[#allocation4 + $0x28] sm:$0xf]
        %v341 = vld [vmem:[#allocation4 + $0x2c] sm:$0xf]
        %v342 = vld [vmem:[#allocation4 + $0x30] sm:$0xf]
        %v343 = vld [vmem:[#allocation4 + $0x34] sm:$0xf]
        %v344 = vld [vmem:[#allocation4 + $0x38] sm:$0xf]
        %v345 = vld [vmem:[#allocation4 + $0x3c] sm:$0xf]
        %v346 = vld [vmem:[#allocation4 + $0x40] sm:$0xf]
        %v347 = vld [vmem:[#allocation4 + $0x44] sm:$0xf]
        %v348 = vld [vmem:[#allocation4 + $0x48] sm:$0xf]
        %v349 = vld [vmem:[#allocation4 + $0x4c] sm:$0xf]
        %v350 = vld [vmem:[#allocation4 + $0x50] sm:$0xf]
        %v351 = vld [vmem:[#allocation4 + $0x54] sm:$0xf]
        %v352 = vld [vmem:[#allocation4 + $0x58] sm:$0xf]
        %v353 = vld [vmem:[#allocation4 + $0x5c] sm:$0xf]
        %v354 = vld [vmem:[#allocation4 + $0x60] sm:$0xf]
        %v355 = vld [vmem:[#allocation4 + $0x64] sm:$0xf]
        %v356 = vld [vmem:[#allocation4 + $0x68] sm:$0xf]
        %v357 = vld [vmem:[#allocation4 + $0x6c] sm:$0xf]
        %v358 = vld [vmem:[#allocation4 + $0x70] sm:$0xf]
        %v359 = vld [vmem:[#allocation4 + $0x74] sm:$0xf]
        %v360 = vld [vmem:[#allocation4 + $0x78] sm:$0xf]
        %v361 = vld [vmem:[#allocation4 + $0x7c] sm:$0xf]
        %v362 = vld [vmem:[#allocation4 + $0x80] sm:$0xf]
        %v363 = vld [vmem:[#allocation4 + $0x84] sm:$0xf]
        %v364 = vld [vmem:[#allocation4 + $0x88] sm:$0xf]
        %v365 = vld [vmem:[#allocation4 + $0x8c] sm:$0xf]
        %v366 = vld [vmem:[#allocation4 + $0x90] sm:$0xf]
        %v367 = vld [vmem:[#allocation4 + $0x94] sm:$0xf]
        %v368 = vld [vmem:[#allocation4 + $0x98] sm:$0xf]
        %v369 = vld [vmem:[#allocation4 + $0x9c] sm:$0xf]
        %v370 = vld [vmem:[#allocation4 + $0xa0] sm:$0xf]
        %v371 = vld [vmem:[#allocation4 + $0xa4] sm:$0xf]
        %v372 = vld [vmem:[#allocation4 + $0xa8] sm:$0xf]
        %v373 = vld [vmem:[#allocation4 + $0xac] sm:$0xf]
        %v374 = vld [vmem:[#allocation4 + $0xb0] sm:$0xf]
        %v375 = vld [vmem:[#allocation4 + $0xb4] sm:$0xf]
        %v376 = vld [vmem:[#allocation4 + $0xb8] sm:$0xf]
        %v377 = vld [vmem:[#allocation4 + $0xbc] sm:$0xf]
        %v378 = vld [vmem:[#allocation4 + $0xc0] sm:$0xf]
        %v379 = vld [vmem:[#allocation4 + $0xc4] sm:$0xf]
        %v380 = vld [vmem:[#allocation4 + $0xc8] sm:$0xf]
        %v381 = vld [vmem:[#allocation4 + $0xcc] sm:$0xf]
        %v382 = vld [vmem:[#allocation4 + $0xd0] sm:$0xf]
        %v383 = vld [vmem:[#allocation4 + $0xd4] sm:$0xf]
        %v384 = vld [vmem:[#allocation4 + $0xd8] sm:$0xf]
        %v385 = vld [vmem:[#allocation4 + $0xdc] sm:$0xf]
        %v386 = vld [vmem:[#allocation4 + $0xe0] sm:$0xf]
        %v387 = vld [vmem:[#allocation4 + $0xe4] sm:$0xf]
        %v388 = vld [vmem:[#allocation4 + $0xe8] sm:$0xf]
        %v389 = vld [vmem:[#allocation4 + $0xec] sm:$0xf]
        %v390 = vld [vmem:[#allocation4 + $0xf0] sm:$0xf]
        %v391 = vld [vmem:[#allocation4 + $0xf4] sm:$0xf]
        %v392 = vld [vmem:[#allocation4 + $0xf8] sm:$0xf]
        %v393 = vld [vmem:[#allocation4 + $0xfc] sm:$0xf]
        %v394 = vld [vmem:[#allocation4 + $0x100] sm:$0xf]
        %v395 = vld [vmem:[#allocation4 + $0x104] sm:$0xf]
        %v396 = vld [vmem:[#allocation4 + $0x108] sm:$0xf]
        %v397 = vld [vmem:[#allocation4 + $0x10c] sm:$0xf]
        %v398 = vld [vmem:[#allocation4 + $0x110] sm:$0xf]
        %v399 = vld [vmem:[#allocation4 + $0x114] sm:$0xf]
        %v400 = vld [vmem:[#allocation4 + $0x118] sm:$0xf]
        %v401 = vld [vmem:[#allocation4 + $0x11c] sm:$0xf]
        %v402 = vld [vmem:[#allocation4 + $0x120] sm:$0xf]
        %v403 = vld [vmem:[#allocation4 + $0x124] sm:$0xf]
        %v404 = vld [vmem:[#allocation4 + $0x128] sm:$0xf]
        %v405 = vld [vmem:[#allocation4 + $0x12c] sm:$0xf]
        %v406 = vld [vmem:[#allocation4 + $0x130] sm:$0xf]
        %v407 = vld [vmem:[#allocation4 + $0x134] sm:$0xf]
        %v408 = vld [vmem:[#allocation4 + $0x138] sm:$0xf]
        %v409 = vld [vmem:[#allocation4 + $0x13c] sm:$0xf]
        %v410 = vld [vmem:[#allocation4 + $0x140] sm:$0xf]
        %v411 = vld [vmem:[#allocation4 + $0x144] sm:$0xf]
        %v412 = vld [vmem:[#allocation4 + $0x148] sm:$0xf]
        %v413 = vld [vmem:[#allocation4 + $0x14c] sm:$0xf]
        %v414 = vld [vmem:[#allocation4 + $0x150] sm:$0xf]
        %v415 = vld [vmem:[#allocation4 + $0x154] sm:$0xf]
        %v416 = vld [vmem:[#allocation4 + $0x158] sm:$0xf]
        %v417 = vld [vmem:[#allocation4 + $0x15c] sm:$0xf]
        %v418 = vld [vmem:[#allocation4 + $0x160] sm:$0xf]
        %v419 = vld [vmem:[#allocation4 + $0x164] sm:$0xf]
        %v420 = vld [vmem:[#allocation4 + $0x168] sm:$0xf]
        %v421 = vld [vmem:[#allocation4 + $0x16c] sm:$0xf]
        %v422 = vld [vmem:[#allocation4 + $0x170] sm:$0xf]
        %v423 = vld [vmem:[#allocation4 + $0x174] sm:$0xf]
        %v424 = vld [vmem:[#allocation4 + $0x178] sm:$0xf]
        %v425 = vld [vmem:[#allocation4 + $0x17c] sm:$0xf]
        %v426 = vld [vmem:[#allocation4 + $0x180] sm:$0xf]
        %v427 = vld [vmem:[#allocation4 + $0x184] sm:$0xf]
        %v428 = vld [vmem:[%s2] sm:$0x1]
        %v430 = vlaneseq
        %v431 = vshrl.u32 %v430, 7
        %v432 = vsub.s32 0, %v431
        %v433 = vrot.slane %v428, %v432
        %v533 = vunpack.c.l.b16 %v330
        %v534 = vunpack.c.l.b16 %v331
        %v535 = vunpack.c.l.b16 %v332
        %v536 = vunpack.c.l.b16 %v333
        %v537 = vunpack.c.l.b16 %v334
        %v538 = vunpack.c.l.b16 %v335
        %v539 = vunpack.c.l.b16 %v336
        %v540 = vunpack.c.l.b16 %v337
        %v541 = vunpack.c.l.b16 %v338
        %v542 = vunpack.c.l.b16 %v339
        %v543 = vunpack.c.l.b16 %v340
        %v544 = vunpack.c.l.b16 %v341
        %v545 = vunpack.c.l.b16 %v342
        %v546 = vunpack.c.l.b16 %v343
        %v547 = vunpack.c.l.b16 %v344
        %v548 = vunpack.c.l.b16 %v345
        %v549 = vunpack.c.l.b16 %v346
        %v550 = vunpack.c.l.b16 %v347
        %v551 = vunpack.c.l.b16 %v348
        %v552 = vunpack.c.l.b16 %v349
        %v553 = vunpack.c.l.b16 %v350
        %v554 = vunpack.c.l.b16 %v351
        %v555 = vunpack.c.l.b16 %v352
        %v556 = vunpack.c.l.b16 %v353
        %v557 = vunpack.c.l.b16 %v354
        %v558 = vunpack.c.l.b16 %v355
        %v559 = vunpack.c.l.b16 %v356
        %v560 = vunpack.c.l.b16 %v357
        %v561 = vunpack.c.l.b16 %v358
        %v562 = vunpack.c.l.b16 %v359
        %v563 = vunpack.c.l.b16 %v360
        %v564 = vunpack.c.l.b16 %v361
        %v565 = vunpack.c.l.b16 %v362
        %v566 = vunpack.c.l.b16 %v363
        %v567 = vunpack.c.l.b16 %v364
        %v568 = vunpack.c.l.b16 %v365
        %v569 = vunpack.c.l.b16 %v366
        %v570 = vunpack.c.l.b16 %v367
        %v571 = vunpack.c.l.b16 %v368
        %v572 = vunpack.c.l.b16 %v369
        %v573 = vunpack.c.l.b16 %v370
        %v574 = vunpack.c.l.b16 %v371
        %v575 = vunpack.c.l.b16 %v372
        %v576 = vunpack.c.l.b16 %v373
        %v577 = vunpack.c.l.b16 %v374
        %v578 = vunpack.c.l.b16 %v375
        %v579 = vunpack.c.l.b16 %v376
        %v580 = vunpack.c.l.b16 %v377
        %v581 = vunpack.c.l.b16 %v378
        %v582 = vunpack.c.l.b16 %v379
        %v583 = vunpack.c.l.b16 %v380
        %v584 = vunpack.c.l.b16 %v381
        %v585 = vunpack.c.l.b16 %v382
        %v586 = vunpack.c.l.b16 %v383
        %v587 = vunpack.c.l.b16 %v384
        %v588 = vunpack.c.l.b16 %v385
        %v589 = vunpack.c.l.b16 %v386
        %v590 = vunpack.c.l.b16 %v387
        %v591 = vunpack.c.l.b16 %v388
        %v592 = vunpack.c.l.b16 %v389
        %v593 = vunpack.c.l.b16 %v390
        %v594 = vunpack.c.l.b16 %v391
        %v595 = vunpack.c.l.b16 %v392
        %v596 = vunpack.c.l.b16 %v393
        %v597 = vunpack.c.l.b16 %v394
        %v598 = vunpack.c.l.b16 %v395
        %v599 = vunpack.c.l.b16 %v396
        %v600 = vunpack.c.l.b16 %v397
        %v601 = vunpack.c.l.b16 %v398
        %v602 = vunpack.c.l.b16 %v399
        %v603 = vunpack.c.l.b16 %v400
        %v604 = vunpack.c.l.b16 %v401
        %v605 = vunpack.c.l.b16 %v402
        %v606 = vunpack.c.l.b16 %v403
        %v607 = vunpack.c.l.b16 %v404
        %v608 = vunpack.c.l.b16 %v405
        %v609 = vunpack.c.l.b16 %v406
        %v610 = vunpack.c.l.b16 %v407
        %v611 = vunpack.c.l.b16 %v408
        %v612 = vunpack.c.l.b16 %v409
        %v613 = vunpack.c.l.b16 %v410
        %v614 = vunpack.c.l.b16 %v411
        %v615 = vunpack.c.l.b16 %v412
        %v616 = vunpack.c.l.b16 %v413
        %v617 = vunpack.c.l.b16 %v414
        %v618 = vunpack.c.l.b16 %v415
        %v619 = vunpack.c.l.b16 %v416
        %v620 = vunpack.c.l.b16 %v417
        %v621 = vunpack.c.l.b16 %v418
        %v622 = vunpack.c.l.b16 %v419
        %v623 = vunpack.c.l.b16 %v420
        %v624 = vunpack.c.l.b16 %v421
        %v625 = vunpack.c.l.b16 %v422
        %v626 = vunpack.c.l.b16 %v423
        %v627 = vunpack.c.l.b16 %v424
        %v628 = vunpack.c.l.b16 %v425
        %v629 = vunpack.c.l.b16 %v426
        %v630 = vunpack.c.l.b16 %v427
        %v631 = vpack.c.b16 %v534, %v533
        %v632 = vpack.c.b16 %v536, %v535
        %v633 = vpack.c.b16 %v538, %v537
        %v634 = vpack.c.b16 %v540, %v539
        %v635 = vpack.c.b16 %v542, %v541
        %v636 = vpack.c.b16 %v544, %v543
        %v637 = vpack.c.b16 %v546, %v545
        %v638 = vpack.c.b16 %v548, %v547
        %v639 = vpack.c.b16 %v550, %v549
        %v640 = vpack.c.b16 %v552, %v551
        %v641 = vpack.c.b16 %v554, %v553
        %v642 = vpack.c.b16 %v556, %v555
        %v643 = vpack.c.b16 %v558, %v557
        %v644 = vpack.c.b16 %v560, %v559
        %v645 = vpack.c.b16 %v562, %v561
        %v646 = vpack.c.b16 %v564, %v563
        %v647 = vpack.c.b16 %v566, %v565
        %v648 = vpack.c.b16 %v568, %v567
        %v649 = vpack.c.b16 %v570, %v569
        %v650 = vpack.c.b16 %v572, %v571
        %v651 = vpack.c.b16 %v574, %v573
        %v652 = vpack.c.b16 %v576, %v575
        %v653 = vpack.c.b16 %v578, %v577
        %v654 = vpack.c.b16 %v580, %v579
        %v655 = vpack.c.b16 %v582, %v581
        %v656 = vpack.c.b16 %v584, %v583
        %v657 = vpack.c.b16 %v586, %v585
        %v658 = vpack.c.b16 %v588, %v587
        %v659 = vpack.c.b16 %v590, %v589
        %v660 = vpack.c.b16 %v592, %v591
        %v661 = vpack.c.b16 %v594, %v593
        %v662 = vpack.c.b16 %v596, %v595
        %v663 = vpack.c.b16 %v598, %v597
        %v664 = vpack.c.b16 %v600, %v599
        %v665 = vpack.c.b16 %v602, %v601
        %v666 = vpack.c.b16 %v604, %v603
        %v667 = vpack.c.b16 %v606, %v605
        %v668 = vpack.c.b16 %v608, %v607
        %v669 = vpack.c.b16 %v610, %v609
        %v670 = vpack.c.b16 %v612, %v611
        %v671 = vpack.c.b16 %v614, %v613
        %v672 = vpack.c.b16 %v616, %v615
        %v673 = vpack.c.b16 %v618, %v617
        %v674 = vpack.c.b16 %v620, %v619
        %v675 = vpack.c.b16 %v622, %v621
        %v676 = vpack.c.b16 %v624, %v623
        %v677 = vpack.c.b16 %v626, %v625
        %v678 = vpack.c.b16 %v628, %v627
        %v679 = vpack.c.b16 %v630, %v629
        %vm729 = vcmask 130048
        %v731 = vsel %vm729, %v322, 0
        %v734 = vsel %vm729, %v329, 0
        %736 = vmatprep.subr.bf16.mxu0 0
        %737 = vmatpush1.bf16.msra.mxu0 %v638
        %738 = vmatprep.subr.bf16.mxu0 0
        %739 = vmatpush1.bf16.msra.mxu0 %v637
        %740 = vmatprep.subr.bf16.mxu0 0
        %741 = vmatpush1.bf16.msra.mxu0 %v636
        %742 = vmatprep.subr.bf16.mxu0 0
        %743 = vmatpush1.bf16.msra.mxu0 %v635
        %744 = vmatprep.subr.bf16.mxu0 0
        %745 = vmatpush1.bf16.msra.mxu0 %v634
        %746 = vmatprep.subr.bf16.mxu0 0
        %747 = vmatpush1.bf16.msra.mxu0 %v633
        %748 = vmatprep.subr.bf16.mxu0 0
        %749 = vmatpush1.bf16.msra.mxu0 %v632
        %750 = vmatprep.subr.bf16.mxu0 0
        %751 = vmatpush1.bf16.msra.mxu0 %v631
        %752 = vmatprep.subr.bf16.mxu0 0
        %753 = vmatpush2.bf16.msra.mxu0 %v646
        %754 = vmatprep.subr.bf16.mxu0 0
        %755 = vmatpush2.bf16.msra.mxu0 %v645
        %756 = vmatprep.subr.bf16.mxu0 0
        %757 = vmatpush2.bf16.msra.mxu0 %v644
        %758 = vmatprep.subr.bf16.mxu0 0
        %759 = vmatpush2.bf16.msra.mxu0 %v643
        %760 = vmatprep.subr.bf16.mxu0 0
        %761 = vmatpush2.bf16.msra.mxu0 %v642
        %762 = vmatprep.subr.bf16.mxu0 0
        %763 = vmatpush2.bf16.msra.mxu0 %v641
        %764 = vmatprep.subr.bf16.mxu0 0
        %765 = vmatpush2.bf16.msra.mxu0 %v640
        %766 = vmatprep.subr.bf16.mxu0 0
        %767 = vmatpush2.bf16.msra.mxu0 %v639
        %768 = vmatprep.mubr.bf16.mxu0 %v317
        %769 = vmatmul.mubr.bf16.gmra.mxu0 %v316
        %v770 = vpop.f32.mrf.mxu0
        %v771 = vadd.f32 %v433, %v770
        %v772 = vpop.f32.mrf.mxu0
        %v773 = vpop.f32.mrf.mxu0
        %v774 = vadd.f32 %v433, %v773
        %v775 = vpop.f32.mrf.mxu0
        %776 = vmatprep.mubr.bf16.mxu0 %v324
        %777 = vmatmul.mubr.bf16.gmra.mxu0 %v323
        %v778 = vpop.f32.mrf.mxu0
        %v779 = vadd.f32 %v433, %v778
        %v780 = vpop.f32.mrf.mxu0
        %v781 = vpop.f32.mrf.mxu0
        %v782 = vadd.f32 %v433, %v781
        %v783 = vpop.f32.mrf.mxu0
        %784 = vdwg.mxu0
        %785 = vmatprep.subr.bf16.mxu0 0
        %786 = vmatpush1.bf16.msra.mxu0 %v654
        %787 = vmatprep.subr.bf16.mxu0 0
        %788 = vmatpush1.bf16.msra.mxu0 %v653
        %789 = vmatprep.subr.bf16.mxu0 0
        %790 = vmatpush1.bf16.msra.mxu0 %v652
        %791 = vmatprep.subr.bf16.mxu0 0
        %792 = vmatpush1.bf16.msra.mxu0 %v651
        %793 = vmatprep.subr.bf16.mxu0 0
        %794 = vmatpush1.bf16.msra.mxu0 %v650
        %795 = vmatprep.subr.bf16.mxu0 0
        %796 = vmatpush1.bf16.msra.mxu0 %v649
        %797 = vmatprep.subr.bf16.mxu0 0
        %798 = vmatpush1.bf16.msra.mxu0 %v648
        %799 = vmatprep.subr.bf16.mxu0 0
        %800 = vmatpush1.bf16.msra.mxu0 %v647
        %801 = vmatprep.subr.bf16.mxu0 0
        %802 = vmatpush2.bf16.msra.mxu0 %v662
        %803 = vmatprep.subr.bf16.mxu0 0
        %804 = vmatpush2.bf16.msra.mxu0 %v661
        %805 = vmatprep.subr.bf16.mxu0 0
        %806 = vmatpush2.bf16.msra.mxu0 %v660
        %807 = vmatprep.subr.bf16.mxu0 0
        %808 = vmatpush2.bf16.msra.mxu0 %v659
        %809 = vmatprep.subr.bf16.mxu0 0
        %810 = vmatpush2.bf16.msra.mxu0 %v658
        %811 = vmatprep.subr.bf16.mxu0 0
        %812 = vmatpush2.bf16.msra.mxu0 %v657
        %813 = vmatprep.subr.bf16.mxu0 0
        %814 = vmatpush2.bf16.msra.mxu0 %v656
        %815 = vmatprep.subr.bf16.mxu0 0
        %816 = vmatpush2.bf16.msra.mxu0 %v655
        %817 = vmatprep.mubr.bf16.mxu0 %v319
        %818 = vmatmul.mubr.bf16.gmra.mxu0 %v318
        %v819 = vpop.f32.mrf.mxu0
        %v820 = vadd.f32 %v771, %v819
        %v821 = vpop.f32.mrf.mxu0
        %v822 = vpop.f32.mrf.mxu0
        %v823 = vadd.f32 %v774, %v822
        %v824 = vpop.f32.mrf.mxu0
        %825 = vmatprep.mubr.bf16.mxu0 %v326
        %826 = vmatmul.mubr.bf16.gmra.mxu0 %v325
        %v827 = vpop.f32.mrf.mxu0
        %v828 = vadd.f32 %v779, %v827
        %v829 = vpop.f32.mrf.mxu0
        %v830 = vpop.f32.mrf.mxu0
        %v831 = vadd.f32 %v782, %v830
        %v832 = vpop.f32.mrf.mxu0
        %833 = vdwg.mxu0
        %834 = vmatprep.subr.bf16.mxu0 0
        %835 = vmatpush1.bf16.msra.mxu0 %v670
        %836 = vmatprep.subr.bf16.mxu0 0
        %837 = vmatpush1.bf16.msra.mxu0 %v669
        %838 = vmatprep.subr.bf16.mxu0 0
        %839 = vmatpush1.bf16.msra.mxu0 %v668
        %840 = vmatprep.subr.bf16.mxu0 0
        %841 = vmatpush1.bf16.msra.mxu0 %v667
        %842 = vmatprep.subr.bf16.mxu0 0
        %843 = vmatpush1.bf16.msra.mxu0 %v666
        %844 = vmatprep.subr.bf16.mxu0 0
        %845 = vmatpush1.bf16.msra.mxu0 %v665
        %846 = vmatprep.subr.bf16.mxu0 0
        %847 = vmatpush1.bf16.msra.mxu0 %v664
        %848 = vmatprep.subr.bf16.mxu0 0
        %849 = vmatpush1.bf16.msra.mxu0 %v663
        %850 = vmatprep.subr.bf16.mxu0 0
        %851 = vmatpush2.bf16.msra.mxu0 %v678
        %852 = vmatprep.subr.bf16.mxu0 0
        %853 = vmatpush2.bf16.msra.mxu0 %v677
        %854 = vmatprep.subr.bf16.mxu0 0
        %855 = vmatpush2.bf16.msra.mxu0 %v676
        %856 = vmatprep.subr.bf16.mxu0 0
        %857 = vmatpush2.bf16.msra.mxu0 %v675
        %858 = vmatprep.subr.bf16.mxu0 0
        %859 = vmatpush2.bf16.msra.mxu0 %v674
        %860 = vmatprep.subr.bf16.mxu0 0
        %861 = vmatpush2.bf16.msra.mxu0 %v673
        %862 = vmatprep.subr.bf16.mxu0 0
        %863 = vmatpush2.bf16.msra.mxu0 %v672
        %864 = vmatprep.subr.bf16.mxu0 0
        %865 = vmatpush2.bf16.msra.mxu0 %v671
        %866 = vmatprep.mubr.bf16.mxu0 %v321
        %867 = vmatmul.mubr.bf16.gmra.mxu0 %v320
        %v868 = vpop.f32.mrf.mxu0
        %v869 = vadd.f32 %v820, %v868
        %v870 = vpop.f32.mrf.mxu0
        %v871 = vpop.f32.mrf.mxu0
        %v872 = vadd.f32 %v823, %v871
        %v873 = vpop.f32.mrf.mxu0
        %874 = vmatprep.mubr.bf16.mxu0 %v328
        %875 = vmatmul.mubr.bf16.gmra.mxu0 %v327
        %v876 = vpop.f32.mrf.mxu0
        %v877 = vadd.f32 %v828, %v876
        %v878 = vpop.f32.mrf.mxu0
        %v879 = vpop.f32.mrf.mxu0
        %v880 = vadd.f32 %v831, %v879
        %v881 = vpop.f32.mrf.mxu0
        %882 = vdwg.mxu0
        %883 = vmatprep.subr.bf16.mxu0 0
        %884 = vmatpush1.bf16.msra.mxu0 0
        %885 = vmatprep.subr.bf16.mxu0 0
        %886 = vmatpush1.bf16.msra.mxu0 0
        %887 = vmatprep.subr.bf16.mxu0 0
        %888 = vmatpush1.bf16.msra.mxu0 0
        %889 = vmatprep.subr.bf16.mxu0 0
        %890 = vmatpush1.bf16.msra.mxu0 0
        %891 = vmatprep.subr.bf16.mxu0 0
        %892 = vmatpush1.bf16.msra.mxu0 0
        %893 = vmatprep.subr.bf16.mxu0 0
        %894 = vmatpush1.bf16.msra.mxu0 0
        %895 = vmatprep.subr.bf16.mxu0 0
        %896 = vmatpush1.bf16.msra.mxu0 0
        %897 = vmatprep.subr.bf16.mxu0 0
        %898 = vmatpush1.bf16.msra.mxu0 %v679
        %899 = vmatprep.subr.bf16.mxu0 0
        %900 = vmatpush2.bf16.msra.mxu0 0
        %901 = vmatprep.subr.bf16.mxu0 0
        %902 = vmatpush2.bf16.msra.mxu0 0
        %903 = vmatprep.subr.bf16.mxu0 0
        %904 = vmatpush2.bf16.msra.mxu0 0
        %905 = vmatprep.subr.bf16.mxu0 0
        %906 = vmatpush2.bf16.msra.mxu0 0
        %907 = vmatprep.subr.bf16.mxu0 0
        %908 = vmatpush2.bf16.msra.mxu0 0
        %909 = vmatprep.subr.bf16.mxu0 0
        %910 = vmatpush2.bf16.msra.mxu0 0
        %911 = vmatprep.subr.bf16.mxu0 0
        %912 = vmatpush2.bf16.msra.mxu0 0
        %913 = vmatprep.subr.bf16.mxu0 0
        %914 = vmatpush2.bf16.msra.mxu0 0
        %915 = vmatprep.mubr.bf16.mxu0 0
        %916 = vmatmul.mubr.bf16.gmra.mxu0 %v731
        %v917 = vpop.f32.mrf.mxu0
        %v918 = vadd.f32 %v869, %v917
        %v919 = vpop.f32.mrf.mxu0
        %v920 = vpop.f32.mrf.mxu0
        %v921 = vadd.f32 %v872, %v920
        %v922 = vpop.f32.mrf.mxu0
        %923 = vmatprep.mubr.bf16.mxu0 0
        %924 = vmatmul.mubr.bf16.gmra.mxu0 %v734
        %v925 = vpop.f32.mrf.mxu0
        %v926 = vadd.f32 %v877, %v925
        %v927 = vpop.f32.mrf.mxu0
        %v928 = vpop.f32.mrf.mxu0
        %v929 = vadd.f32 %v880, %v928
        %v930 = vpop.f32.mrf.mxu0
        %931 = vdwg.mxu0
        %v932 = vmax.f32 %v918, 0.0
        %v933 = vmax.f32 %v921, 0.0
        %v934 = vmax.f32 %v926, 0.0
        %v935 = vmax.f32 %v929, 0.0
        %v936 = vpack.c.bf16 %v933, %v932
        %v937 = vpack.c.bf16 %v935, %v934
        %v938 = vld [vmem:[#allocation6] sm:$0xf]
        %v939 = vld [vmem:[#allocation6 + $0x4] sm:$0xf]
        %v940 = vld [vmem:[#allocation6 + $0x8] sm:$0xf]
        %v941 = vld [vmem:[#allocation6 + $0xc] sm:$0xf]
        %v942 = vld [vmem:[#allocation6 + $0x10] sm:$0xf]
        %v943 = vld [vmem:[#allocation6 + $0x14] sm:$0xf]
        %v944 = vld [vmem:[#allocation6 + $0x18] sm:$0xf]
        %v945 = vld [vmem:[#allocation6 + $0x1c] sm:$0xf]
        %v946 = vld [vmem:[#allocation6 + $0x20] sm:$0xf]
        %v947 = vld [vmem:[#allocation6 + $0x24] sm:$0xf]
        %v948 = vld [vmem:[#allocation6 + $0x28] sm:$0xf]
        %v949 = vld [vmem:[#allocation6 + $0x2c] sm:$0xf]
        %v950 = vld [vmem:[#allocation6 + $0x30] sm:$0xf]
        %v951 = vld [vmem:[#allocation6 + $0x34] sm:$0xf]
        %v952 = vld [vmem:[#allocation6 + $0x38] sm:$0xf]
        %v953 = vld [vmem:[#allocation6 + $0x3c] sm:$0xf]
        %v954 = vld [vmem:[%s4] sm:$0x1]
        %v956 = vlaneseq
        %v957 = vshrl.u32 %v956, 7
        %v958 = vsub.s32 0, %v957
        %v959 = vrot.slane %v954, %v958
        %v977 = vunpack.c.l.b16 %v938
        %v978 = vunpack.c.l.b16 %v939
        %v979 = vunpack.c.l.b16 %v940
        %v980 = vunpack.c.l.b16 %v941
        %v981 = vunpack.c.l.b16 %v942
        %v982 = vunpack.c.l.b16 %v943
        %v983 = vunpack.c.l.b16 %v944
        %v984 = vunpack.c.l.b16 %v945
        %v985 = vunpack.c.l.b16 %v946
        %v986 = vunpack.c.l.b16 %v947
        %v987 = vunpack.c.l.b16 %v948
        %v988 = vunpack.c.l.b16 %v949
        %v989 = vunpack.c.l.b16 %v950
        %v990 = vunpack.c.l.b16 %v951
        %v991 = vunpack.c.l.b16 %v952
        %v992 = vunpack.c.l.b16 %v953
        %v993 = vpack.c.b16 %v978, %v977
        %v994 = vpack.c.b16 %v980, %v979
        %v995 = vpack.c.b16 %v982, %v981
        %v996 = vpack.c.b16 %v984, %v983
        %v997 = vpack.c.b16 %v986, %v985
        %v998 = vpack.c.b16 %v988, %v987
        %v999 = vpack.c.b16 %v990, %v989
        %v1000 = vpack.c.b16 %v992, %v991
        %1009 = vmatprep.subr.bf16.mxu0 0
        %1010 = vmatpush1.bf16.msra.mxu0 %v1000
        %1011 = vmatprep.subr.bf16.mxu0 0
        %1012 = vmatpush1.bf16.msra.mxu0 %v999
        %1013 = vmatprep.subr.bf16.mxu0 0
        %1014 = vmatpush1.bf16.msra.mxu0 %v998
        %1015 = vmatprep.subr.bf16.mxu0 0
        %1016 = vmatpush1.bf16.msra.mxu0 %v997
        %1017 = vmatprep.subr.bf16.mxu0 0
        %1018 = vmatpush1.bf16.msra.mxu0 %v996
        %1019 = vmatprep.subr.bf16.mxu0 0
        %1020 = vmatpush1.bf16.msra.mxu0 %v995
        %1021 = vmatprep.subr.bf16.mxu0 0
        %1022 = vmatpush1.bf16.msra.mxu0 %v994
        %1023 = vmatprep.subr.bf16.mxu0 0
        %1024 = vmatpush1.bf16.msra.mxu0 %v993
        %1025 = vmatprep.subr.bf16.mxu0 0
        %1026 = vmatpush2.bf16.msra.mxu0 0
        %1027 = vmatprep.subr.bf16.mxu0 0
        %1028 = vmatpush2.bf16.msra.mxu0 0
        %1029 = vmatprep.subr.bf16.mxu0 0
        %1030 = vmatpush2.bf16.msra.mxu0 0
        %1031 = vmatprep.subr.bf16.mxu0 0
        %1032 = vmatpush2.bf16.msra.mxu0 0
        %1033 = vmatprep.subr.bf16.mxu0 0
        %1034 = vmatpush2.bf16.msra.mxu0 0
        %1035 = vmatprep.subr.bf16.mxu0 0
        %1036 = vmatpush2.bf16.msra.mxu0 0
        %1037 = vmatprep.subr.bf16.mxu0 0
        %1038 = vmatpush2.bf16.msra.mxu0 0
        %1039 = vmatprep.subr.bf16.mxu0 0
        %1040 = vmatpush2.bf16.msra.mxu0 0
        %1041 = vmatprep.mubr.bf16.mxu0 0
        %1042 = vmatmul.mubr.bf16.gmra.mxu0 %v936
        %v1043 = vpop.f32.mrf.mxu0
        %v1044 = vadd.f32 %v959, %v1043
        %v1045 = vpop.f32.mrf.mxu0
        %v1046 = vpop.f32.mrf.mxu0
        %v1047 = vadd.f32 %v959, %v1046
        %v1048 = vpop.f32.mrf.mxu0
        %1049 = vmatprep.mubr.bf16.mxu0 0
        %1050 = vmatmul.mubr.bf16.gmra.mxu0 %v937
        %v1051 = vpop.f32.mrf.mxu0
        %v1052 = vadd.f32 %v959, %v1051
        %v1053 = vpop.f32.mrf.mxu0
        %v1054 = vpop.f32.mrf.mxu0
        %v1055 = vadd.f32 %v959, %v1054
        %v1056 = vpop.f32.mrf.mxu0
        %1057 = vdwg.mxu0
        %v1058 = vpack.c.bf16 %v1047, %v1044
        %v1059 = vpack.c.bf16 %v1055, %v1052
        %v1062 = vunpack.c.l.b16 %v1058
        %v1063 = vunpack.c.h.b16 %v1058
        %v1064 = vunpack.c.l.b16 %v1059
        %v1065 = vunpack.c.h.b16 %v1059
        %v1066 = vpack.c.b16 %v1062, %v1062
        %v1067 = vpack.c.b16 %v1063, %v1063
        %v1068 = vpack.c.b16 %v1064, %v1064
        %v1069 = vpack.c.b16 %v1065, %v1065
        %1074 = vst [vmem:[%s275] sm:$0xf] %v1066
        %1075 = vst [vmem:[%s275 + $0x4] sm:$0xf] %v1067
        %1076 = vst [vmem:[%s275 + $0x8] sm:$0xf] %v1068
        %1077 = vst [vmem:[%s275 + $0xc] sm:$0xf] %v1069
        %s1078 = sand.u32 %s138, 1
        %s1079 = sand.u32 %s138, 1
        %s1080 = smul.addr %s1079, 16
        %s1081 = scalar_lea.vmem [#allocation7], %s1080
        // Predicated region
        $region53: #{neural_net_forward.1} parent=39 // pred_check
          %p1082 = pneg %p148
        $region54: #{neural_net_forward.1} parent=39 // pred_check_branch
          %1084 = sbr.rel (%p1082) target = $region56
        $region55: #{neural_net_forward.1} parent=39 // pred_region
          %s1085 = smul.u32 4, %s20
          %s1086 = ssub.s32 5, %s1085
          %p1087 = scmp.lt.s32.totalorder %s1086, 4
          %s1088 = scalar_select %p1087, %s1086, 4
          %s1089 = smul.u32 64, %s1088
          %p1090 = scmp.ne.s32.totalorder 0, %s1089
          %s1091 = smul.addr %s1085, 4
          %s1092 = scalar_lea.vmem %s5, %s1091
          // Predicated region
          $region57: #{neural_net_forward.1} parent=55 // pred_check
            %p1093 = pneg %p1090
          $region58: #{neural_net_forward.1} parent=55 // pred_check_branch
            %1095 = sbr.rel (%p1093) target = $region60
          $region59: #{neural_net_forward.1} parent=55 // pred_region
            // Predicated region
            $region61: #{neural_net_forward.1} parent=59 // pred_check
              _
            $region62: #{neural_net_forward.1} parent=59 // pred_check_branch
              %1097 = sbr.rel target = $region64
            $region63: #{neural_net_forward.1} parent=59 // pred_region
              // Predicated region
              $region83: #{neural_net_forward.1} parent=63 // pred_check
                _
              $region84: #{neural_net_forward.1} parent=63 // pred_check_branch
                %1153 = sbr.rel (0) target = $region86
              $region85: #{neural_net_forward.1} parent=63 // pred_region
                %s1155 = ssub.s32 16, 1
                %s1156 = sshrl.u32 %s1088, 2
                // While loop
                $region87: #{neural_net_forward.1} parent=85 // loop_pre_header
                  _
                $region88: #{neural_net_forward.1} parent=85 // loop_header
                  %s1158 = sphi 0, %s1160
                  %p1159 = scmp.ge.s32.totalorder %s1158, %s1156
                  %s1163 = sphi 0, %s1176
                  %s1164 = sphi %s1081, %s1179
                  %s1165 = sphi %s1092, %s1180
                $region89: #{neural_net_forward.1} parent=85 // loop_header_branch
                  %1162 = sbr.rel (%p1159) target = $region93
                $region90: #{neural_net_forward.1} parent=85 // loop_body
                  %v1166 = vld [vmem:[%s1164] sm:%s1155]
                  %1167 = vst [vmem:[%s1165] sm:%s1155] %v1166
                  %v1168 = vld [vmem:[%s1164 + $0x4] sm:%s1155]
                  %1169 = vst [vmem:[%s1165 + $0x4] sm:%s1155] %v1168
                  %v1170 = vld [vmem:[%s1164 + $0x8] sm:%s1155]
                  %1171 = vst [vmem:[%s1165 + $0x8] sm:%s1155] %v1170
                  %v1172 = vld [vmem:[%s1164 + $0xc] sm:%s1155]
                  %1173 = vst [vmem:[%s1165 + $0xc] sm:%s1155] %v1172
                  %s1174 = sadd.s32 1, %s1163
                  %p1175 = scmp.ge.s32.totalorder %s1174, %s1156
                  %s1176 = scalar_select %p1175, 0, %s1174
                  %s1177 = smul.u32 %s1176, 16
                  %s1178 = smul.u32 %s1176, 16
                  %s1179 = scalar_lea.vmem %s1081, %s1177 [#allocation7]
                  %s1180 = scalar_lea.vmem %s1092, %s1178
                $region91: #{neural_net_forward.1} parent=85 // loop_footer
                  %s1160 = sadd.s32 %s1158, 1
                $region92: #{neural_net_forward.1} parent=85 // loop_footer_branch
                  %1157 = sbr.rel target = $region88
                $region93: #{neural_net_forward.1} parent=85 // loop_exit
                  _
                %s1181 = sshrl.u32 %s1088, 2
                %s1182 = sand.u32 %s1088, 3
                %s1183 = smul.u32 %s1181, 4
                %s1184 = smul.u32 4, %s1183
                %s1185 = scalar_lea.vmem %s1081, %s1184 [#allocation7]
                %s1186 = smul.u32 4, %s1183
                %s1187 = scalar_lea.vmem %s1092, %s1186
                // While loop
                $region94: #{neural_net_forward.1} parent=85 // loop_pre_header
                  _
                $region95: #{neural_net_forward.1} parent=85 // loop_header
                  %s1189 = sphi 0, %s1191
                  %p1190 = scmp.ge.s32.totalorder %s1189, %s1182
                  %s1194 = sphi 0, %s1201
                  %s1195 = sphi %s1185, %s1204
                  %s1196 = sphi %s1187, %s1205
                $region96: #{neural_net_forward.1} parent=85 // loop_header_branch
                  %1193 = sbr.rel (%p1190) target = $region100
                $region97: #{neural_net_forward.1} parent=85 // loop_body
                  %v1197 = vld [vmem:[%s1195] sm:%s1155]
                  %1198 = vst [vmem:[%s1196] sm:%s1155] %v1197
                  %s1199 = sadd.s32 1, %s1194
                  %p1200 = scmp.ge.s32.totalorder %s1199, %s1182
                  %s1201 = scalar_select %p1200, 0, %s1199
                  %s1202 = smul.u32 %s1201, 4
                  %s1203 = smul.u32 %s1201, 4
                  %s1204 = scalar_lea.vmem %s1185, %s1202 [#allocation7]
                  %s1205 = scalar_lea.vmem %s1187, %s1203
                $region98: #{neural_net_forward.1} parent=85 // loop_footer
                  %s1191 = sadd.s32 %s1189, 1
                $region99: #{neural_net_forward.1} parent=85 // loop_footer_branch
                  %1188 = sbr.rel target = $region95
                $region100: #{neural_net_forward.1} parent=85 // loop_exit
                  _
              $region86: #{neural_net_forward.1} parent=63 // pred_fallthru
                _
            $region64: #{neural_net_forward.1} parent=59 // pred_fallthru
              _
            // Predicated region
            $region65: #{neural_net_forward.1} parent=59 // pred_check
              _
            $region66: #{neural_net_forward.1} parent=59 // pred_check_branch
              %1099 = sbr.rel (0) target = $region68
            $region67: #{neural_net_forward.1} parent=59 // pred_region
              %s1101 = ssub.s32 16, 1
              %s1102 = sshrl.u32 %s1088, 2
              // While loop
              $region69: #{neural_net_forward.1} parent=67 // loop_pre_header
                _
              $region70: #{neural_net_forward.1} parent=67 // loop_header
                %s1104 = sphi 0, %s1106
                %p1105 = scmp.ge.s32.totalorder %s1104, %s1102
                %s1109 = sphi 0, %s1122
                %s1110 = sphi %s1081, %s1125
                %s1111 = sphi %s1092, %s1126
              $region71: #{neural_net_forward.1} parent=67 // loop_header_branch
                %1108 = sbr.rel (%p1105) target = $region75
              $region72: #{neural_net_forward.1} parent=67 // loop_body
                %v1112 = vld [vmem:[%s1110] sm:%s1101]
                %1113 = vst [vmem:[%s1111] sm:%s1101] %v1112
                %v1114 = vld [vmem:[%s1110 + $0x4] sm:%s1101]
                %1115 = vst [vmem:[%s1111 + $0x4] sm:%s1101] %v1114
                %v1116 = vld [vmem:[%s1110 + $0x8] sm:%s1101]
                %1117 = vst [vmem:[%s1111 + $0x8] sm:%s1101] %v1116
                %v1118 = vld [vmem:[%s1110 + $0xc] sm:%s1101]
                %1119 = vst [vmem:[%s1111 + $0xc] sm:%s1101] %v1118
                %s1120 = sadd.s32 1, %s1109
                %p1121 = scmp.ge.s32.totalorder %s1120, %s1102
                %s1122 = scalar_select %p1121, 0, %s1120
                %s1123 = smul.u32 %s1122, 16
                %s1124 = smul.u32 %s1122, 16
                %s1125 = scalar_lea.vmem %s1081, %s1123 [#allocation7]
                %s1126 = scalar_lea.vmem %s1092, %s1124
              $region73: #{neural_net_forward.1} parent=67 // loop_footer
                %s1106 = sadd.s32 %s1104, 1
              $region74: #{neural_net_forward.1} parent=67 // loop_footer_branch
                %1103 = sbr.rel target = $region70
              $region75: #{neural_net_forward.1} parent=67 // loop_exit
                _
              %s1127 = sshrl.u32 %s1088, 2
              %s1128 = sand.u32 %s1088, 3
              %s1129 = smul.u32 %s1127, 4
              %s1130 = smul.u32 4, %s1129
              %s1131 = scalar_lea.vmem %s1081, %s1130 [#allocation7]
              %s1132 = smul.u32 4, %s1129
              %s1133 = scalar_lea.vmem %s1092, %s1132
              // While loop
              $region76: #{neural_net_forward.1} parent=67 // loop_pre_header
                _
              $region77: #{neural_net_forward.1} parent=67 // loop_header
                %s1135 = sphi 0, %s1137
                %p1136 = scmp.ge.s32.totalorder %s1135, %s1128
                %s1140 = sphi 0, %s1147
                %s1141 = sphi %s1131, %s1150
                %s1142 = sphi %s1133, %s1151
              $region78: #{neural_net_forward.1} parent=67 // loop_header_branch
                %1139 = sbr.rel (%p1136) target = $region82
              $region79: #{neural_net_forward.1} parent=67 // loop_body
                %v1143 = vld [vmem:[%s1141] sm:%s1101]
                %1144 = vst [vmem:[%s1142] sm:%s1101] %v1143
                %s1145 = sadd.s32 1, %s1140
                %p1146 = scmp.ge.s32.totalorder %s1145, %s1128
                %s1147 = scalar_select %p1146, 0, %s1145
                %s1148 = smul.u32 %s1147, 4
                %s1149 = smul.u32 %s1147, 4
                %s1150 = scalar_lea.vmem %s1131, %s1148 [#allocation7]
                %s1151 = scalar_lea.vmem %s1133, %s1149
              $region80: #{neural_net_forward.1} parent=67 // loop_footer
                %s1137 = sadd.s32 %s1135, 1
              $region81: #{neural_net_forward.1} parent=67 // loop_footer_branch
                %1134 = sbr.rel target = $region77
              $region82: #{neural_net_forward.1} parent=67 // loop_exit
                _
            $region68: #{neural_net_forward.1} parent=59 // pred_fallthru
              _
          $region60: #{neural_net_forward.1} parent=55 // pred_fallthru
            _
          %1206 = vnop
        $region56: #{neural_net_forward.1} parent=39 // pred_fallthru
          _
      $region40: #{neural_net_forward.1} parent=5 // pred_fallthru
        _
      %p1207 = scmp.le.s32.totalorder 2, %s15
      // Predicated region
      $region101: #{neural_net_forward.1} parent=5 // pred_check
        %p1208 = pneg %p1207
      $region102: #{neural_net_forward.1} parent=5 // pred_check_branch
        %1210 = sbr.rel (%p1208) target = $region104
      $region103: #{neural_net_forward.1} parent=5 // pred_region
        %s1211 = ssub.s32 %s15, 2
        // Predicated region
        $region105: #{neural_net_forward.1} parent=103 // pred_check
          %p1212 = pneg %p154
        $region106: #{neural_net_forward.1} parent=103 // pred_check_branch
          %1214 = sbr.rel (%p1212) target = $region108
        $region107: #{neural_net_forward.1} parent=103 // pred_region
          %s1215 = sand.u32 %s139, 1
          %s1216 = sand.u32 %s139, 1
          %s1217 = smul.addr %s1216, 16
          %s1218 = scalar_lea.vmem [#allocation7], %s1217
        $region108: #{neural_net_forward.1} parent=103 // pred_fallthru
          _
      $region104: #{neural_net_forward.1} parent=5 // pred_fallthru
        _
    $region6: #{neural_net_forward.1} parent=1 // loop_footer
      %s19 = sadd.s32 1, %s15
    $region7: #{neural_net_forward.1} parent=1 // loop_footer_branch
      %14 = sbr.rel target = $region3
    $region8: #{neural_net_forward.1} parent=1 // loop_exit
      _
    %1219 = vsyncpa [#allocation3], 1
    %s1220 = scalar_lea.sflag [#allocation3], 1
    %1221 = vsyncpa %s1220, 1
    %1222 = vsyncpa [#allocation5], 1

</llo_original>
